<compile_context>
chip_gen: v7x
topology: tpu7x:2x2x1
jax: 0.10.0
libtpu: 0.0.40
codegen_flags: <defaults>
</compile_context>

<pallas_src>
import functools
import math

import jax
import jax.numpy as jnp
from jax import lax
from jax.experimental import pallas as pl
from jax.experimental.pallas import tpu as pltpu


def _round_up(x, m):
    return ((x + m - 1) // m) * m


def _cdiv(a, b):
    return (a + b - 1) // b


# --------------------------------------------------------------------------- #
# Kernels
# --------------------------------------------------------------------------- #
def _head_kernel_resident(x_ref, w_ref, b_ref, o_ref):
    """out = x @ W^T + b   — full nf contraction in one MXU push.

    x_ref: (tile_m, nf)   activation row tile
    w_ref: (tw_pad, nf)   full weight, resident in VMEM
    b_ref: (1, tw_pad)    bias (f32)
    o_ref: (tile_m, tw_pad)
    """
    acc = lax.dot_general(x_ref[...], w_ref[...],
                          (((1,), (1,)), ((), ())),
                          preferred_element_type=jnp.float32)
    o_ref[...] = (acc + b_ref[...]).astype(o_ref.dtype)


def _head_kernel_ktiled(x_ref, w_ref, b_ref, o_ref, acc_ref, *, nf, tk):
    """Same contraction, K-tiled over nf with an f32 VMEM accumulator."""
    k = pl.program_id(1)

    @pl.when(k == 0)
    def _():
        acc_ref[...] = jnp.zeros_like(acc_ref)

    x = x_ref[...]
    w = w_ref[...]
    if nf % tk != 0:
        # Ragged last K block: out-of-bounds columns hold garbage (possibly NaN),
        # so mask BOTH operands to zero past nf so their product is exactly 0.
        base = k * tk
        xcol = lax.broadcasted_iota(jnp.int32, x.shape, 1) + base
        x = jnp.where(xcol < nf, x, jnp.zeros_like(x))
        wcol = lax.broadcasted_iota(jnp.int32, w.shape, 1) + base
        w = jnp.where(wcol < nf, w, jnp.zeros_like(w))

    acc_ref[...] += lax.dot_general(x, w, (((1,), (1,)), ((), ())),
                                    preferred_element_type=jnp.float32)

    @pl.when(k == pl.num_programs(1) - 1)
    def _():
        o_ref[...] = (acc_ref[...] + b_ref[...]).astype(o_ref.dtype)


# --------------------------------------------------------------------------- #
# Wrapper
# --------------------------------------------------------------------------- #
def flatten_head_forward(x, weight, bias, *, compute_dtype=None,
                         tile_m=None, tk=None, force_k_tiling=False):
    """FlattenHead.forward (eval mode; dropout = identity).

    x:      (B, n_vars, d_model, patch_num)
    weight: (target_window, nf)  with nf = d_model * patch_num   (PyTorch layout)
    bias:   (target_window,)
    Returns (B, n_vars, target_window).
    """
    B, n_vars, d_model, patch_num = x.shape
    nf = d_model * patch_num
    tw = weight.shape[0]
    assert weight.shape == (tw, nf), (weight.shape, nf)
    assert bias.shape == (tw,), bias.shape

    out_dtype = x.dtype

    # --- nn.Flatten(start_dim=-2): free contiguous reshape, no kernel work. ---
    M = B * n_vars
    x2d = x.reshape(M, nf)

    # Optional bf16 compute path (halves HBM read bytes; numerics differ from the
    # f32 PyTorch reference -> opt-in only). Accumulation stays f32.
    if compute_dtype is not None:
        x2d = x2d.astype(compute_dtype)
        weight = weight.astype(compute_dtype)

    in_it = jnp.dtype(x2d.dtype).itemsize
    out_it = jnp.dtype(out_dtype).itemsize

    # --- Lane-dense output width: pad target_window to a multiple of 128 so the
    #     stores are unmasked and the MXU N dimension is filled. (In production,
    #     pre-pad weight/bias once at parameter-load time instead of per call.)
    tw_pad = _round_up(tw, 128)
    if tw_pad != tw:
        weight = jnp.pad(weight, ((0, tw_pad - tw), (0, 0)))
        bias = jnp.pad(bias, ((0, tw_pad - tw),))
    b2d = bias.reshape(1, tw_pad).astype(jnp.float32)

    # --- Generation-aware VMEM plan -----------------------------------------
    try:
        vmem_cap = int(pltpu.get_tpu_info().vmem_capacity_bytes)
    except Exception:  # not on TPU / interpret mode
        vmem_cap = 128 << 20
    # Scoped-VMEM limit we request: leave headroom for Mosaic internals
    # (~112 MiB on v5e/v6e, ~56 MiB on v7x's 64 MiB).
    vmem_limit = vmem_cap - max(8 << 20, vmem_cap // 8)
    budget = (vmem_limit * 9) // 10

    bias_bytes = 2 * tw_pad * 4
    weight_bytes = tw_pad * nf * in_it
    # Budget the resident weight at 2x in case single-buffering is unavailable.
    use_k = bool(force_k_tiling) or (2 * weight_bytes > budget // 2)

    def pick_tile_m(avail_bytes, per_row_bytes, row_stream_bytes):
        # ~4 MiB of activations per step amortizes the ~0.35us step overhead
        # (~85%+ of HBM roofline per measured tiling data), bounded by VMEM.
        t = max(8, (4 << 20) // max(1, row_stream_bytes))
        t = min(t, max(8, avail_bytes // max(1, per_row_bytes)), 2048)
        if M > 8:
            # Keep >= 2 grid steps along the row axis so "parallel" can actually
            # split work across v7x's two TensorCores.
            t = min(t, _round_up(_cdiv(M, 2), 8))
        t = min(t, _round_up(M, 8))
        return max(8, (t // 8) * 8)

    if not use_k:
        # ------------------ Path A: resident weight, 1-D grid over rows -------
        avail = budget - 2 * weight_bytes - bias_bytes
        per_row = 2 * (nf * in_it + tw_pad * out_it)
        tm = tile_m or pick_tile_m(avail, per_row, nf * in_it)
        grid = (_cdiv(M, tm),)

        def build(single_buffer_resident):
            def resident_spec(shape):
                if single_buffer_resident:
                    return pl.BlockSpec(shape, lambda i: (0, 0),
                                        pipeline_mode=pl.Buffered(1))
                return pl.BlockSpec(shape, lambda i: (0, 0))

            return pl.pallas_call(
                _head_kernel_resident,
                out_shape=jax.ShapeDtypeStruct((M, tw_pad), out_dtype),
                grid_spec=pltpu.PrefetchScalarGridSpec(
                    num_scalar_prefetch=0,
                    grid=grid,
                    in_specs=[
                        pl.BlockSpec((tm, nf), lambda i: (i, 0)),  # activations
                        resident_spec((tw_pad, nf)),               # weight (resident)
                        resident_spec((1, tw_pad)),                # bias   (resident)
                    ],
                    out_specs=pl.BlockSpec((tm, tw_pad), lambda i: (i, 0)),
                ),
                compiler_params=pltpu.CompilerParams(
                    dimension_semantics=("parallel",),
                    vmem_limit_bytes=int(vmem_limit)),
            )

        try:
            out = build(True)(x2d, weight, b2d)
        except Exception:
            # pipeline_mode=Buffered(1) not supported on this jax build; the VMEM
            # plan already assumed double-buffered residents, so just retry.
            out = build(False)(x2d, weight, b2d)
    else:
        # ------------------ Path B: K-tiled over nf (large weights) -----------
        tk_ = tk or 512
        tk_ = max(128, (tk_ // 128) * 128)
        tk_ = min(tk_, _round_up(nf, 128))
        nk = _cdiv(nf, tk_)

        avail = budget - 2 * tw_pad * tk_ * in_it - bias_bytes
        per_row = 2 * tk_ * in_it + 2 * tw_pad * out_it + tw_pad * 4
        tm = tile_m or pick_tile_m(avail, per_row, tk_ * in_it)
        grid = (_cdiv(M, tm), nk)

        kernel = functools.partial(_head_kernel_ktiled, nf=nf, tk=tk_)

        def build(single_buffer_bias):
            if single_buffer_bias:
                bias_spec = pl.BlockSpec((1, tw_pad), lambda i, k: (0, 0),
                                         pipeline_mode=pl.Buffered(1))
            else:
                bias_spec = pl.BlockSpec((1, tw_pad), lambda i, k: (0, 0))
            return pl.pallas_call(
                kernel,
                out_shape=jax.ShapeDtypeStruct((M, tw_pad), out_dtype),
                grid_spec=pltpu.PrefetchScalarGridSpec(
                    num_scalar_prefetch=0,
                    grid=grid,
                    in_specs=[
                        pl.BlockSpec((tm, tk_), lambda i, k: (i, k)),     # activations
                        pl.BlockSpec((tw_pad, tk_), lambda i, k: (0, k)),  # weight K tile
                        bias_spec,
                    ],
                    out_specs=pl.BlockSpec((tm, tw_pad), lambda i, k: (i, 0)),
                    scratch_shapes=[pltpu.VMEM((tm, tw_pad), jnp.float32)],
                ),
                compiler_params=pltpu.CompilerParams(
                    dimension_semantics=("parallel", "arbitrary"),
                    vmem_limit_bytes=int(vmem_limit)),
            )

        try:
            out = build(True)(x2d, weight, b2d)
        except Exception:
            out = build(False)(x2d, weight, b2d)

    # --- Dropout: identity at inference. ---
    # TODO(synk): training-mode dropout (head_dropout > 0) not implemented.
    if tw_pad != tw:
        out = out[:, :tw]
    return out.reshape(B, n_vars, tw)


# --------------------------------------------------------------------------- #
# Self-test
# --------------------------------------------------------------------------- #
if __name__ == "__main__":
    base_key = jax.random.PRNGKey(0)

    def run_case(B, n_vars, d_model, patch_num, target_window, **kw):
        nf = d_model * patch_num
        k1, k2, k3 = jax.random.split(
            jax.random.fold_in(base_key, nf * 1000 + target_window), 3)
        x = jax.random.normal(k1, (B, n_vars, d_model, patch_num),
                              dtype=jnp.float32)
        # nn.Linear default init: U(-1/sqrt(nf), 1/sqrt(nf)).
        bound = 1.0 / math.sqrt(nf)
        w = jax.random.uniform(k2, (target_window, nf), jnp.float32,
                               -bound, bound)
        b = jax.random.uniform(k3, (target_window,), jnp.float32,
                               -bound, bound)

        out = jax.block_until_ready(flatten_head_forward(x, w, b, **kw))

        ref = (jnp.einsum("mk,nk->mn", x.reshape(-1, nf), w,
                          precision=jax.lax.Precision.HIGHEST)
               .reshape(B, n_vars, target_window) + b)

        assert out.shape == (B, n_vars, target_window), out.shape
        assert jnp.allclose(out, ref, atol=1e-4, rtol=1e-4), \
            f"mismatch vs reference (kw={kw})"

    # Path A: resident weight, single fused matmul per row tile.
    run_case(2, 4, 16, 8, 32)
    # Path B: forced K-tiling with nf=320 not divisible by tk=128 to exercise
    # the accumulator and ragged-K masking.
    run_case(2, 4, 16, 20, 32, force_k_tiling=True, tk=128)

    print("KERNEL_OK")
</pallas_src>

<mosaic_0001>
module attributes {stable_mosaic.version = 11 : i64} {
  func.func @_head_kernel_resident(%arg0: i32, %arg1: memref<8x128xf32, #tpu.memory_space<vmem>>, %arg2: memref<128x128xf32, #tpu.memory_space<vmem>>, %arg3: memref<1x128xf32, #tpu.memory_space<vmem>>, %arg4: memref<8x128xf32, #tpu.memory_space<vmem>>) attributes {dimension_semantics = [#tpu.dimension_semantics<parallel>], iteration_bounds = array<i64: 1>, scalar_prefetch = 0 : i64, scratch_operands = 0 : i64, tpu.core_type = #tpu.core_type<tc>, window_params = [{transform_indices = @transform_0, window_bounds = array<i64: 8, 128>}, {pipeline_mode = #tpu.pipeline_mode<synchronous>, transform_indices = @transform_1, window_bounds = array<i64: 128, 128>}, {pipeline_mode = #tpu.pipeline_mode<synchronous>, transform_indices = @transform_2, window_bounds = array<i64: 1, 128>}, {transform_indices = @transform_3, window_bounds = array<i64: 8, 128>}]} {
    %c0 = arith.constant 0 : index
    %c0_0 = arith.constant 0 : index
    %0 = vector.load %arg1[%c0, %c0_0] : memref<8x128xf32, #tpu.memory_space<vmem>>, vector<8x128xf32>
    %c0_1 = arith.constant 0 : index
    %c0_2 = arith.constant 0 : index
    %1 = vector.load %arg2[%c0_1, %c0_2] : memref<128x128xf32, #tpu.memory_space<vmem>>, vector<128x128xf32>
    %cst = arith.constant dense<0.000000e+00> : vector<8x128xf32>
    %2 = tpu.matmul %0, %1, %cst {dimension_numbers = #tpu.dot_dimension_numbers<[1], [1], [0], [0], [0, 0, 1, 0], [], []>} : vector<8x128xf32>, vector<128x128xf32>, vector<8x128xf32> -> vector<8x128xf32>
    %c0_3 = arith.constant 0 : index
    %c0_4 = arith.constant 0 : index
    %3 = vector.load %arg3[%c0_3, %c0_4] : memref<1x128xf32, #tpu.memory_space<vmem>>, vector<1x128xf32>
    %4 = vector.broadcast %3 : vector<1x128xf32> to vector<8x128xf32>
    %5 = arith.addf %2, %4 : vector<8x128xf32>
    %c0_5 = arith.constant 0 : index
    %c0_6 = arith.constant 0 : index
    %6 = vector.load %arg4[%c0_5, %c0_6] : memref<8x128xf32, #tpu.memory_space<vmem>>, vector<8x128xf32>
    tpu.vector_store %arg4[%c0_5, %c0_6], %5 {strides = array<i32>} : memref<8x128xf32, #tpu.memory_space<vmem>>, vector<8x128xf32>,
    return
  }
  func.func @transform_0(%arg0: i32) -> (i32, i32) {
    %c0_i32 = arith.constant 0 : i32
    %c0_i32_0 = arith.constant 0 : i32
    return %arg0, %c0_i32 : i32, i32
  }
  func.func @transform_1(%arg0: i32) -> (i32, i32) {
    %c0_i32 = arith.constant 0 : i32
    %c0_i32_0 = arith.constant 0 : i32
    %c0_i32_1 = arith.constant 0 : i32
    return %c0_i32, %c0_i32_0 : i32, i32
  }
  func.func @transform_2(%arg0: i32) -> (i32, i32) {
    %c0_i32 = arith.constant 0 : i32
    %c0_i32_0 = arith.constant 0 : i32
    %c0_i32_1 = arith.constant 0 : i32
    return %c0_i32, %c0_i32_0 : i32, i32
  }
  func.func @transform_3(%arg0: i32) -> (i32, i32) {
    %c0_i32 = arith.constant 0 : i32
    %c0_i32_0 = arith.constant 0 : i32
    return %arg0, %c0_i32 : i32, i32
  }
}

module attributes {stable_mosaic.version = 11 : i64} {
  func.func @_head_kernel_resident(%arg0: i32, %arg1: memref<8x128xf32, #tpu.memory_space<vmem>>, %arg2: memref<128x128xf32, #tpu.memory_space<vmem>>, %arg3: memref<1x128xf32, #tpu.memory_space<vmem>>, %arg4: memref<8x128xf32, #tpu.memory_space<vmem>>) attributes {dimension_semantics = [#tpu.dimension_semantics<parallel>], iteration_bounds = array<i64: 1>, scalar_prefetch = 0 : i64, scratch_operands = 0 : i64, tpu.core_type = #tpu.core_type<tc>, window_params = [{transform_indices = @transform_0, window_bounds = array<i64: 8, 128>}, {pipeline_mode = #tpu.pipeline_mode<synchronous>, transform_indices = @transform_1, window_bounds = array<i64: 128, 128>}, {pipeline_mode = #tpu.pipeline_mode<synchronous>, transform_indices = @transform_2, window_bounds = array<i64: 1, 128>}, {transform_indices = @transform_3, window_bounds = array<i64: 8, 128>}]} {
    %c0 = arith.constant 0 : index
    %c0_0 = arith.constant 0 : index
    %0 = vector.load %arg1[%c0, %c0_0] : memref<8x128xf32, #tpu.memory_space<vmem>>, vector<8x128xf32>
    %c0_1 = arith.constant 0 : index
    %c0_2 = arith.constant 0 : index
    %1 = vector.load %arg2[%c0_1, %c0_2] : memref<128x128xf32, #tpu.memory_space<vmem>>, vector<128x128xf32>
    %cst = arith.constant dense<0.000000e+00> : vector<8x128xf32>
    %2 = tpu.matmul %0, %1, %cst {dimension_numbers = #tpu.dot_dimension_numbers<[1], [1], [0], [0], [0, 0, 1, 0], [], []>} : vector<8x128xf32>, vector<128x128xf32>, vector<8x128xf32> -> vector<8x128xf32>
    %c0_3 = arith.constant 0 : index
    %c0_4 = arith.constant 0 : index
    %3 = vector.load %arg3[%c0_3, %c0_4] : memref<1x128xf32, #tpu.memory_space<vmem>>, vector<1x128xf32>
    %4 = vector.broadcast %3 : vector<1x128xf32> to vector<8x128xf32>
    %5 = arith.addf %2, %4 : vector<8x128xf32>
    %c0_5 = arith.constant 0 : index
    %c0_6 = arith.constant 0 : index
    %6 = vector.load %arg4[%c0_5, %c0_6] : memref<8x128xf32, #tpu.memory_space<vmem>>, vector<8x128xf32>
    tpu.vector_store %arg4[%c0_5, %c0_6], %5 {strides = array<i32>} : memref<8x128xf32, #tpu.memory_space<vmem>>, vector<8x128xf32>,
    return
  }
  func.func @transform_0(%arg0: i32) -> (i32, i32) {
    %c0_i32 = arith.constant 0 : i32
    %c0_i32_0 = arith.constant 0 : i32
    return %arg0, %c0_i32 : i32, i32
  }
  func.func @transform_1(%arg0: i32) -> (i32, i32) {
    %c0_i32 = arith.constant 0 : i32
    %c0_i32_0 = arith.constant 0 : i32
    %c0_i32_1 = arith.constant 0 : i32
    return %c0_i32, %c0_i32_0 : i32, i32
  }
  func.func @transform_2(%arg0: i32) -> (i32, i32) {
    %c0_i32 = arith.constant 0 : i32
    %c0_i32_0 = arith.constant 0 : i32
    %c0_i32_1 = arith.constant 0 : i32
    return %c0_i32, %c0_i32_0 : i32, i32
  }
  func.func @transform_3(%arg0: i32) -> (i32, i32) {
    %c0_i32 = arith.constant 0 : i32
    %c0_i32_0 = arith.constant 0 : i32
    return %arg0, %c0_i32 : i32, i32
  }
}

</mosaic_0001>

<llo_original>
// kernel: tpu_custom_call.1
$region0: #{tpu_custom_call.1}
  #allocation0 [shape = 'u32[]', space=smem, size = 0x4, offset = 0x4, fixed_abs, tag = 'smem constant byte address 0x4 - core index']
  #allocation1 [shape = 'u32[144,128]{1,0:T(1,128)}', space=vmem, size = 0x12000, scoped, tag = 'internal scratch']
  %s0 = inlined_call_operand.hbm [shape: f32[8,128], index: 0, kind: input, shape index: {}]
  %s1 = inlined_call_operand.hbm [shape: f32[128,128], index: 1, kind: input, shape index: {}]
  %s2 = inlined_call_operand.hbm [shape: f32[1,128], index: 2, kind: input, shape index: {}]
  %s3 = inlined_call_operand.hbm [shape: f32[8,128], index: 3, kind: output, shape index: {}]
  %s4 = sld [smem:[#allocation0]]
  $region34: #{tpu_custom_call.1} parent=0
    _
  %s6 = ssub.s32 1, %s4
  %s7 = scalar_select 0, %s6, %s4
  $region1: #{tpu_custom_call.1} parent=0
    #allocation2 [shape = 'u8[4096]{0}', space=vmem, size = 0x1000, scoped, tag = 'input window, operand 0, single buffered']
    #allocation3 [shape = 's32[1]{0}', space=sflag, size = 0x4, scoped, tag = 'scoped memory for tpu_custom_call.1']
    #allocation4 [shape = 's32[1]{0}', space=sflag, size = 0x4, scoped, tag = 'scoped memory for tpu_custom_call.1']
    #allocation5 [shape = 'u8[65536]{0}', space=vmem, size = 0x10000, scoped, tag = 'input window, operand 1, single buffered']
    #allocation6 [shape = 's32[1]{0}', space=sflag, size = 0x4, scoped, tag = 'scoped memory for tpu_custom_call.1']
    #allocation7 [shape = 'u8[512]{0}', space=vmem, size = 0x400, scoped, tag = 'input window, operand 2, single buffered']
    #allocation8 [shape = 'u8[4096]{0}', space=vmem, size = 0x1000, scoped, tag = 'output window, operand 0, single buffered']
    %8 = vsyncpa [#allocation3], 0
    %9 = vsyncpa [#allocation6], 0
    %10 = vsyncpa [#allocation4], 0
    // Predicated region
    $region2: #{tpu_custom_call.1} parent=1 // pred_check
      _
    $region3: #{tpu_custom_call.1} parent=1 // pred_check_branch
      %12 = sbr.rel (0) target = $region5
    $region4: #{tpu_custom_call.1} parent=1 // pred_region
      %s14 = ssub.s32 128, 128
      %15 = vsyncadd [#allocation3], %s14
      %s17 = sshll.u32 [#allocation2], 4
      %s18 = int_to_ptr.vmem [resolvable:$true] %s17
      %20 = dma.hbm_to_vmem [thread:$0]  %s0, 128, %s18, [#allocation3]
    $region5: #{tpu_custom_call.1} parent=1 // pred_fallthru
      _
    // Predicated region
    $region6: #{tpu_custom_call.1} parent=1 // pred_check
      _
    $region7: #{tpu_custom_call.1} parent=1 // pred_check_branch
      %22 = sbr.rel (0) target = $region9
    $region8: #{tpu_custom_call.1} parent=1 // pred_region
      %s24 = ssub.s32 2048, 2048
      %25 = vsyncadd [#allocation6], %s24
      %s26 = sshll.u32 [#allocation5], 4
      %s27 = int_to_ptr.vmem [resolvable:$true] %s26
      %32 = dma.hbm_to_vmem [thread:$0]  %s1, 2048, %s27, [#allocation6], 128, 128, 8
    $region9: #{tpu_custom_call.1} parent=1 // pred_fallthru
      _
    // Predicated region
    $region10: #{tpu_custom_call.1} parent=1 // pred_check
      _
    $region11: #{tpu_custom_call.1} parent=1 // pred_check_branch
      %34 = sbr.rel (0) target = $region13
    $region12: #{tpu_custom_call.1} parent=1 // pred_region
      %s36 = ssub.s32 16, 16
      %37 = vsyncadd [#allocation6], %s36
      %s39 = sshll.u32 [#allocation7], 4
      %s40 = int_to_ptr.vmem [resolvable:$true] %s39
      %42 = dma.hbm_to_vmem [thread:$0]  %s2, 16, %s40, [#allocation6]
    $region13: #{tpu_custom_call.1} parent=1 // pred_fallthru
      _
    // Predicated region
    $region14: #{tpu_custom_call.1} parent=1 // pred_check
      _
    $region15: #{tpu_custom_call.1} parent=1 // pred_check_branch
      %44 = sbr.rel (0) target = $region17
    $region16: #{tpu_custom_call.1} parent=1 // pred_region
      %45 = dma.done [#allocation3], 128
    $region17: #{tpu_custom_call.1} parent=1 // pred_fallthru
      _
    // Predicated region
    $region18: #{tpu_custom_call.1} parent=1 // pred_check
      _
    $region19: #{tpu_custom_call.1} parent=1 // pred_check_branch
      %47 = sbr.rel (0) target = $region21
    $region20: #{tpu_custom_call.1} parent=1 // pred_region
      %48 = dma.done [#allocation6], 2048
    $region21: #{tpu_custom_call.1} parent=1 // pred_fallthru
      _
    // Predicated region
    $region22: #{tpu_custom_call.1} parent=1 // pred_check
      _
    $region23: #{tpu_custom_call.1} parent=1 // pred_check_branch
      %50 = sbr.rel (0) target = $region25
    $region24: #{tpu_custom_call.1} parent=1 // pred_region
      %51 = dma.done [#allocation6], 16
    $region25: #{tpu_custom_call.1} parent=1 // pred_fallthru
      _
    %v52 = vld [vmem:[#allocation2] sm:$0xff]
    %v53 = vld [vmem:[#allocation5] sm:$0xff]
    %v54 = vld [vmem:[#allocation5 + $0x8] sm:$0xff]
    %v55 = vld [vmem:[#allocation5 + $0x10] sm:$0xff]
    %v56 = vld [vmem:[#allocation5 + $0x18] sm:$0xff]
    %v57 = vld [vmem:[#allocation5 + $0x20] sm:$0xff]
    %v58 = vld [vmem:[#allocation5 + $0x28] sm:$0xff]
    %v59 = vld [vmem:[#allocation5 + $0x30] sm:$0xff]
    %v60 = vld [vmem:[#allocation5 + $0x38] sm:$0xff]
    %v61 = vld [vmem:[#allocation5 + $0x40] sm:$0xff]
    %v62 = vld [vmem:[#allocation5 + $0x48] sm:$0xff]
    %v63 = vld [vmem:[#allocation5 + $0x50] sm:$0xff]
    %v64 = vld [vmem:[#allocation5 + $0x58] sm:$0xff]
    %v65 = vld [vmem:[#allocation5 + $0x60] sm:$0xff]
    %v66 = vld [vmem:[#allocation5 + $0x68] sm:$0xff]
    %v67 = vld [vmem:[#allocation5 + $0x70] sm:$0xff]
    %v68 = vld [vmem:[#allocation5 + $0x78] sm:$0xff]
    %v69 = vld [vmem:[#allocation7] sm:$0x1]
    %v71 = vlaneseq
    %v72 = vshrl.u32 %v71, 7
    %v73 = vsub.s32 0, %v72
    %v74 = vrot.slane %v69, %v73
    %76 = vmatprep.subr.mxu0 0.0
    %77 = vmatpush1.xpose.msra.mxu0 %v53
    %78 = vmatprep.subr.mxu0 0.0
    %79 = vmatpush1.xpose.msra.mxu0 %v54
    %80 = vmatprep.subr.mxu0 0.0
    %81 = vmatpush1.xpose.msra.mxu0 %v55
    %82 = vmatprep.subr.mxu0 0.0
    %83 = vmatpush1.xpose.msra.mxu0 %v56
    %84 = vmatprep.subr.mxu0 0.0
    %85 = vmatpush1.xpose.msra.mxu0 %v57
    %86 = vmatprep.subr.mxu0 0.0
    %87 = vmatpush1.xpose.msra.mxu0 %v58
    %88 = vmatprep.subr.mxu0 0.0
    %89 = vmatpush1.xpose.msra.mxu0 %v59
    %90 = vmatprep.subr.mxu0 0.0
    %91 = vmatpush1.xpose.msra.mxu0 %v60
    %92 = vmatprep.subr.mxu0 0.0
    %93 = vmatpush1.xpose.msra.mxu0 %v61
    %94 = vmatprep.subr.mxu0 0.0
    %95 = vmatpush1.xpose.msra.mxu0 %v62
    %96 = vmatprep.subr.mxu0 0.0
    %97 = vmatpush1.xpose.msra.mxu0 %v63
    %98 = vmatprep.subr.mxu0 0.0
    %99 = vmatpush1.xpose.msra.mxu0 %v64
    %100 = vmatprep.subr.mxu0 0.0
    %101 = vmatpush1.xpose.msra.mxu0 %v65
    %102 = vmatprep.subr.mxu0 0.0
    %103 = vmatpush1.xpose.msra.mxu0 %v66
    %104 = vmatprep.subr.mxu0 0.0
    %105 = vmatpush1.xpose.msra.mxu0 %v67
    %106 = vmatprep.subr.mxu0 0.0
    %107 = vmatpush1.xpose.msra.mxu0 %v68
    %108 = vmatprep.subr.mxu0 0.0
    %109 = vmatpush1.xpose.msra.mxu0 0.0
    %110 = vmatprep.subr.mxu0 0.0
    %111 = vmatpush1.xpose.msra.mxu0 0.0
    %112 = vmatprep.subr.mxu0 0.0
    %113 = vmatpush1.xpose.msra.mxu0 0.0
    %114 = vmatprep.subr.mxu0 0.0
    %115 = vmatpush1.xpose.msra.mxu0 0.0
    %116 = vmatprep.subr.mxu0 0.0
    %117 = vmatpush1.xpose.msra.mxu0 0.0
    %118 = vmatprep.subr.mxu0 0.0
    %119 = vmatpush1.xpose.msra.mxu0 0.0
    %120 = vmatprep.subr.mxu0 0.0
    %121 = vmatpush1.xpose.msra.mxu0 0.0
    %122 = vmatprep.subr.mxu0 0.0
    %123 = vmatpush1.xpose.msra.mxu0 0.0
    %124 = vmatprep.subr.mxu0 0.0
    %125 = vmatpush1.xpose.msra.mxu0 0.0
    %126 = vmatprep.subr.mxu0 0.0
    %127 = vmatpush1.xpose.msra.mxu0 0.0
    %128 = vmatprep.subr.mxu0 0.0
    %129 = vmatpush1.xpose.msra.mxu0 0.0
    %130 = vmatprep.subr.mxu0 0.0
    %131 = vmatpush1.xpose.msra.mxu0 0.0
    %132 = vmatprep.subr.mxu0 0.0
    %133 = vmatpush1.xpose.msra.mxu0 0.0
    %134 = vmatprep.subr.mxu0 0.0
    %135 = vmatpush1.xpose.msra.mxu0 0.0
    %136 = vmatprep.subr.mxu0 0.0
    %137 = vmatpush1.xpose.msra.mxu0 0.0
    %138 = vmatprep.subr.mxu0 0.0
    %139 = vmatpush1.xpose.msra.mxu0 0.0
    %140 = vmatprep.mubr.f32.mxu0 0.0
    %141 = vmatmul.mubr.f32.gmra.mrb[0].mxu0 %v52
    %v142 = vpop.f32.mrb[0].mxu0
    %v143 = vadd.f32 %v74, %v142
    %v144 = vpop.f32.mrb[0].mxu0
    %145 = vdwg.mxu0
    %146 = vst [vmem:[#allocation8] sm:$0xff] %v143
    // Predicated region
    $region26: #{tpu_custom_call.1} parent=1 // pred_check
      _
    $region27: #{tpu_custom_call.1} parent=1 // pred_check_branch
      %148 = sbr.rel (0) target = $region29
    $region28: #{tpu_custom_call.1} parent=1 // pred_region
      %s150 = ssub.s32 128, 128
      %151 = vsyncadd [#allocation4], %s150
      %s153 = sshll.u32 [#allocation8], 4
      %s154 = int_to_ptr.vmem [resolvable:$true] %s153
      %156 = dma.vmem_to_hbm [thread:$0]  %s154, 128, %s3, [#allocation4]
    $region29: #{tpu_custom_call.1} parent=1 // pred_fallthru
      _
    // Predicated region
    $region30: #{tpu_custom_call.1} parent=1 // pred_check
      _
    $region31: #{tpu_custom_call.1} parent=1 // pred_check_branch
      %158 = sbr.rel (0) target = $region33
    $region32: #{tpu_custom_call.1} parent=1 // pred_region
      %159 = dma.done [#allocation4], 128
    $region33: #{tpu_custom_call.1} parent=1 // pred_fallthru
      _
    %160 = vsyncpa [#allocation3], 1
    %161 = vsyncpa [#allocation6], 1
    %162 = vsyncpa [#allocation4], 1

// kernel: tpu_custom_call.1
$region0: #{tpu_custom_call.1}
  #allocation0 [shape = 'u32[]', space=smem, size = 0x4, offset = 0x4, fixed_abs, tag = 'smem constant byte address 0x4 - core index']
  #allocation1 [shape = 'u32[144,128]{1,0:T(1,128)}', space=vmem, size = 0x12000, scoped, tag = 'internal scratch']
  %s0 = inlined_call_operand.hbm [shape: f32[8,128], index: 0, kind: input, shape index: {}]
  %s1 = inlined_call_operand.hbm [shape: f32[128,128], index: 1, kind: input, shape index: {}]
  %s2 = inlined_call_operand.hbm [shape: f32[1,128], index: 2, kind: input, shape index: {}]
  %s3 = inlined_call_operand.hbm [shape: f32[8,128], index: 3, kind: output, shape index: {}]
  %s4 = sld [smem:[#allocation0]]
  $region34: #{tpu_custom_call.1} parent=0
    _
  %s6 = ssub.s32 1, %s4
  %s7 = scalar_select 0, %s6, %s4
  $region1: #{tpu_custom_call.1} parent=0
    #allocation2 [shape = 'u8[4096]{0}', space=vmem, size = 0x1000, scoped, tag = 'input window, operand 0, single buffered']
    #allocation3 [shape = 's32[1]{0}', space=sflag, size = 0x4, scoped, tag = 'scoped memory for tpu_custom_call.1']
    #allocation4 [shape = 's32[1]{0}', space=sflag, size = 0x4, scoped, tag = 'scoped memory for tpu_custom_call.1']
    #allocation5 [shape = 'u8[65536]{0}', space=vmem, size = 0x10000, scoped, tag = 'input window, operand 1, single buffered']
    #allocation6 [shape = 's32[1]{0}', space=sflag, size = 0x4, scoped, tag = 'scoped memory for tpu_custom_call.1']
    #allocation7 [shape = 'u8[512]{0}', space=vmem, size = 0x400, scoped, tag = 'input window, operand 2, single buffered']
    #allocation8 [shape = 'u8[4096]{0}', space=vmem, size = 0x1000, scoped, tag = 'output window, operand 0, single buffered']
    %8 = vsyncpa [#allocation3], 0
    %9 = vsyncpa [#allocation6], 0
    %10 = vsyncpa [#allocation4], 0
    // Predicated region
    $region2: #{tpu_custom_call.1} parent=1 // pred_check
      _
    $region3: #{tpu_custom_call.1} parent=1 // pred_check_branch
      %12 = sbr.rel (0) target = $region5
    $region4: #{tpu_custom_call.1} parent=1 // pred_region
      %s14 = ssub.s32 128, 128
      %15 = vsyncadd [#allocation3], %s14
      %s17 = sshll.u32 [#allocation2], 4
      %s18 = int_to_ptr.vmem [resolvable:$true] %s17
      %20 = dma.hbm_to_vmem [thread:$0]  %s0, 128, %s18, [#allocation3]
    $region5: #{tpu_custom_call.1} parent=1 // pred_fallthru
      _
    // Predicated region
    $region6: #{tpu_custom_call.1} parent=1 // pred_check
      _
    $region7: #{tpu_custom_call.1} parent=1 // pred_check_branch
      %22 = sbr.rel (0) target = $region9
    $region8: #{tpu_custom_call.1} parent=1 // pred_region
      %s24 = ssub.s32 2048, 2048
      %25 = vsyncadd [#allocation6], %s24
      %s26 = sshll.u32 [#allocation5], 4
      %s27 = int_to_ptr.vmem [resolvable:$true] %s26
      %32 = dma.hbm_to_vmem [thread:$0]  %s1, 2048, %s27, [#allocation6], 128, 128, 8
    $region9: #{tpu_custom_call.1} parent=1 // pred_fallthru
      _
    // Predicated region
    $region10: #{tpu_custom_call.1} parent=1 // pred_check
      _
    $region11: #{tpu_custom_call.1} parent=1 // pred_check_branch
      %34 = sbr.rel (0) target = $region13
    $region12: #{tpu_custom_call.1} parent=1 // pred_region
      %s36 = ssub.s32 16, 16
      %37 = vsyncadd [#allocation6], %s36
      %s39 = sshll.u32 [#allocation7], 4
      %s40 = int_to_ptr.vmem [resolvable:$true] %s39
      %42 = dma.hbm_to_vmem [thread:$0]  %s2, 16, %s40, [#allocation6]
    $region13: #{tpu_custom_call.1} parent=1 // pred_fallthru
      _
    // Predicated region
    $region14: #{tpu_custom_call.1} parent=1 // pred_check
      _
    $region15: #{tpu_custom_call.1} parent=1 // pred_check_branch
      %44 = sbr.rel (0) target = $region17
    $region16: #{tpu_custom_call.1} parent=1 // pred_region
      %45 = dma.done [#allocation3], 128
    $region17: #{tpu_custom_call.1} parent=1 // pred_fallthru
      _
    // Predicated region
    $region18: #{tpu_custom_call.1} parent=1 // pred_check
      _
    $region19: #{tpu_custom_call.1} parent=1 // pred_check_branch
      %47 = sbr.rel (0) target = $region21
    $region20: #{tpu_custom_call.1} parent=1 // pred_region
      %48 = dma.done [#allocation6], 2048
    $region21: #{tpu_custom_call.1} parent=1 // pred_fallthru
      _
    // Predicated region
    $region22: #{tpu_custom_call.1} parent=1 // pred_check
      _
    $region23: #{tpu_custom_call.1} parent=1 // pred_check_branch
      %50 = sbr.rel (0) target = $region25
    $region24: #{tpu_custom_call.1} parent=1 // pred_region
      %51 = dma.done [#allocation6], 16
    $region25: #{tpu_custom_call.1} parent=1 // pred_fallthru
      _
    %v52 = vld [vmem:[#allocation2] sm:$0xff]
    %v53 = vld [vmem:[#allocation5] sm:$0xff]
    %v54 = vld [vmem:[#allocation5 + $0x8] sm:$0xff]
    %v55 = vld [vmem:[#allocation5 + $0x10] sm:$0xff]
    %v56 = vld [vmem:[#allocation5 + $0x18] sm:$0xff]
    %v57 = vld [vmem:[#allocation5 + $0x20] sm:$0xff]
    %v58 = vld [vmem:[#allocation5 + $0x28] sm:$0xff]
    %v59 = vld [vmem:[#allocation5 + $0x30] sm:$0xff]
    %v60 = vld [vmem:[#allocation5 + $0x38] sm:$0xff]
    %v61 = vld [vmem:[#allocation5 + $0x40] sm:$0xff]
    %v62 = vld [vmem:[#allocation5 + $0x48] sm:$0xff]
    %v63 = vld [vmem:[#allocation5 + $0x50] sm:$0xff]
    %v64 = vld [vmem:[#allocation5 + $0x58] sm:$0xff]
    %v65 = vld [vmem:[#allocation5 + $0x60] sm:$0xff]
    %v66 = vld [vmem:[#allocation5 + $0x68] sm:$0xff]
    %v67 = vld [vmem:[#allocation5 + $0x70] sm:$0xff]
    %v68 = vld [vmem:[#allocation5 + $0x78] sm:$0xff]
    %v69 = vld [vmem:[#allocation7] sm:$0x1]
    %v71 = vlaneseq
    %v72 = vshrl.u32 %v71, 7
    %v73 = vsub.s32 0, %v72
    %v74 = vrot.slane %v69, %v73
    %76 = vmatprep.subr.mxu0 0.0
    %77 = vmatpush1.xpose.msra.mxu0 %v53
    %78 = vmatprep.subr.mxu0 0.0
    %79 = vmatpush1.xpose.msra.mxu0 %v54
    %80 = vmatprep.subr.mxu0 0.0
    %81 = vmatpush1.xpose.msra.mxu0 %v55
    %82 = vmatprep.subr.mxu0 0.0
    %83 = vmatpush1.xpose.msra.mxu0 %v56
    %84 = vmatprep.subr.mxu0 0.0
    %85 = vmatpush1.xpose.msra.mxu0 %v57
    %86 = vmatprep.subr.mxu0 0.0
    %87 = vmatpush1.xpose.msra.mxu0 %v58
    %88 = vmatprep.subr.mxu0 0.0
    %89 = vmatpush1.xpose.msra.mxu0 %v59
    %90 = vmatprep.subr.mxu0 0.0
    %91 = vmatpush1.xpose.msra.mxu0 %v60
    %92 = vmatprep.subr.mxu0 0.0
    %93 = vmatpush1.xpose.msra.mxu0 %v61
    %94 = vmatprep.subr.mxu0 0.0
    %95 = vmatpush1.xpose.msra.mxu0 %v62
    %96 = vmatprep.subr.mxu0 0.0
    %97 = vmatpush1.xpose.msra.mxu0 %v63
    %98 = vmatprep.subr.mxu0 0.0
    %99 = vmatpush1.xpose.msra.mxu0 %v64
    %100 = vmatprep.subr.mxu0 0.0
    %101 = vmatpush1.xpose.msra.mxu0 %v65
    %102 = vmatprep.subr.mxu0 0.0
    %103 = vmatpush1.xpose.msra.mxu0 %v66
    %104 = vmatprep.subr.mxu0 0.0
    %105 = vmatpush1.xpose.msra.mxu0 %v67
    %106 = vmatprep.subr.mxu0 0.0
    %107 = vmatpush1.xpose.msra.mxu0 %v68
    %108 = vmatprep.subr.mxu0 0.0
    %109 = vmatpush1.xpose.msra.mxu0 0.0
    %110 = vmatprep.subr.mxu0 0.0
    %111 = vmatpush1.xpose.msra.mxu0 0.0
    %112 = vmatprep.subr.mxu0 0.0
    %113 = vmatpush1.xpose.msra.mxu0 0.0
    %114 = vmatprep.subr.mxu0 0.0
    %115 = vmatpush1.xpose.msra.mxu0 0.0
    %116 = vmatprep.subr.mxu0 0.0
    %117 = vmatpush1.xpose.msra.mxu0 0.0
    %118 = vmatprep.subr.mxu0 0.0
    %119 = vmatpush1.xpose.msra.mxu0 0.0
    %120 = vmatprep.subr.mxu0 0.0
    %121 = vmatpush1.xpose.msra.mxu0 0.0
    %122 = vmatprep.subr.mxu0 0.0
    %123 = vmatpush1.xpose.msra.mxu0 0.0
    %124 = vmatprep.subr.mxu0 0.0
    %125 = vmatpush1.xpose.msra.mxu0 0.0
    %126 = vmatprep.subr.mxu0 0.0
    %127 = vmatpush1.xpose.msra.mxu0 0.0
    %128 = vmatprep.subr.mxu0 0.0
    %129 = vmatpush1.xpose.msra.mxu0 0.0
    %130 = vmatprep.subr.mxu0 0.0
    %131 = vmatpush1.xpose.msra.mxu0 0.0
    %132 = vmatprep.subr.mxu0 0.0
    %133 = vmatpush1.xpose.msra.mxu0 0.0
    %134 = vmatprep.subr.mxu0 0.0
    %135 = vmatpush1.xpose.msra.mxu0 0.0
    %136 = vmatprep.subr.mxu0 0.0
    %137 = vmatpush1.xpose.msra.mxu0 0.0
    %138 = vmatprep.subr.mxu0 0.0
    %139 = vmatpush1.xpose.msra.mxu0 0.0
    %140 = vmatprep.mubr.f32.mxu0 0.0
    %141 = vmatmul.mubr.f32.gmra.mrb[0].mxu0 %v52
    %v142 = vpop.f32.mrb[0].mxu0
    %v143 = vadd.f32 %v74, %v142
    %v144 = vpop.f32.mrb[0].mxu0
    %145 = vdwg.mxu0
    %146 = vst [vmem:[#allocation8] sm:$0xff] %v143
    // Predicated region
    $region26: #{tpu_custom_call.1} parent=1 // pred_check
      _
    $region27: #{tpu_custom_call.1} parent=1 // pred_check_branch
      %148 = sbr.rel (0) target = $region29
    $region28: #{tpu_custom_call.1} parent=1 // pred_region
      %s150 = ssub.s32 128, 128
      %151 = vsyncadd [#allocation4], %s150
      %s153 = sshll.u32 [#allocation8], 4
      %s154 = int_to_ptr.vmem [resolvable:$true] %s153
      %156 = dma.vmem_to_hbm [thread:$0]  %s154, 128, %s3, [#allocation4]
    $region29: #{tpu_custom_call.1} parent=1 // pred_fallthru
      _
    // Predicated region
    $region30: #{tpu_custom_call.1} parent=1 // pred_check
      _
    $region31: #{tpu_custom_call.1} parent=1 // pred_check_branch
      %158 = sbr.rel (0) target = $region33
    $region32: #{tpu_custom_call.1} parent=1 // pred_region
      %159 = dma.done [#allocation4], 128
    $region33: #{tpu_custom_call.1} parent=1 // pred_fallthru
      _
    %160 = vsyncpa [#allocation3], 1
    %161 = vsyncpa [#allocation6], 1
    %162 = vsyncpa [#allocation4], 1

</llo_original>
